<compile_context>
chip_gen: v5e
topology: v5e:2x2
jax: 0.10.0
libtpu: 0.0.40
codegen_flags: <defaults>
</compile_context>

<pallas_src>
import functools
import math

import jax
import jax.numpy as jnp
from jax.experimental import pallas as pl
from jax.experimental.pallas import tpu as pltpu

_LANE = 128


def _round_down(x, a):
    return (x // a) * a


def _sublane_align(itemsize):
    # Packed sublane tile height per dtype width (f32:8, bf16:16, int8/fp8:32).
    return {4: 8, 2: 16, 1: 32}.get(itemsize, 8)


def _vmem_budget():
    """(input-block byte budget, vmem_limit_bytes), derived from this chip's VMEM."""
    try:
        info = pltpu.get_tpu_info()
        vmem_cap = int(getattr(info, "vmem_capacity_bytes", 64 * 1024 * 1024))
    except Exception:
        vmem_cap = 64 * 1024 * 1024  # conservative (v7x per-TC VMEM)
    # Input block ~ 1/8 of VMEM -> double-buffered input ~ 1/4, leaving room for the
    # output blocks, the f32 accumulator and compiler-internal scratch.
    block_budget = max(4 * 1024 * 1024, vmem_cap // 8)
    vmem_limit = min(int(vmem_cap * 0.75), 100 * 1024 * 1024)
    return block_budget, vmem_limit


# ---------------------------------------------------------------------------
# Variant 1: reduce an interior/leading axis (K on sublanes, N on lanes).
# ---------------------------------------------------------------------------

def _mean_sublane_kernel(x_ref, o_ref, acc_ref, *, inv_k, k_total, sub):
    # x_ref: (tb, tk, tn) block; o_ref: (tb, tn); acc_ref: (tb, sub, tn) f32 scratch.
    k = pl.program_id(2)

    @pl.when(k == 0)
    def _():
        acc_ref[...] = jnp.zeros_like(acc_ref)

    tb, tk, tn = x_ref.shape
    xb = x_ref[...].astype(jnp.float32)
    if k_total % tk != 0:
        # Mask the padded (garbage) rows of the partial last K block.
        row = jax.lax.broadcasted_iota(jnp.int32, (tb, tk, tn), 1)
        valid = k_total - k * tk  # >= tk for interior blocks -> no-op mask
        xb = jnp.where(row < valid, xb, 0.0)

    if sub > 1:
        # Keep 8 sublanes live in the hot loop (pure VALU adds); 8->1 reduce at finalize.
        acc_ref[...] += jnp.sum(xb.reshape(tb, tk // sub, sub, tn), axis=1)
    else:
        acc_ref[...] += jnp.sum(xb, axis=1, keepdims=True)

    @pl.when(k == pl.num_programs(2) - 1)
    def _():
        o_ref[...] = (jnp.sum(acc_ref[...], axis=1) * inv_k).astype(o_ref.dtype)


def _pick_sublane_tiles(B, K, N, itemsize, budget):
    sub_a = _sublane_align(itemsize)
    # Lane (surviving) dim: full extent if narrow, else a multiple of 128.
    tn = N if N <= _LANE else min(_round_down(N, _LANE), 2048)
    # Sublane (reduced) dim: cap so tb can still reach >= 8 within the budget.
    if K <= sub_a:
        tk = K
    else:
        tk_cap = max(sub_a, _round_down(budget // (8 * tn * itemsize), sub_a))
        tk = max(sub_a, min(_round_down(K, sub_a), 1024, tk_cap))
    # Leading dim from remaining budget; output block (tb, tn) needs tb % 8 == 0 or tb == B.
    tb = max(1, budget // (tk * tn * itemsize))
    tb = min(tb, max(1, budget // (8 * tn * 4)))  # keep the f32 (tb, 8, tn) acc bounded too
    if tb >= B:
        tb = B
    else:
        tb = min(max(8, _round_down(tb, 8)), B)
    return tb, tk, tn


def _mean_over_sublane_axis(x3):
    """x3: (B, K, N) -> (B, N), mean over the middle (sublane) axis."""
    B, K, N = x3.shape
    itemsize = jnp.dtype(x3.dtype).itemsize
    budget, vmem_limit = _vmem_budget()
    tb, tk, tn = _pick_sublane_tiles(B, K, N, itemsize, budget)
    sub = 8 if tk % 8 == 0 else 1

    grid = (pl.cdiv(B, tb), pl.cdiv(N, tn), pl.cdiv(K, tk))  # reduction axis last
    kernel = functools.partial(_mean_sublane_kernel, inv_k=1.0 / K, k_total=K, sub=sub)
    cost = pl.CostEstimate(flops=B * K * N, transcendentals=0,
                           bytes_accessed=B * K * N * itemsize + B * N * itemsize)

    return pl.pallas_call(
        kernel,
        out_shape=jax.ShapeDtypeStruct((B, N), x3.dtype),
        grid_spec=pltpu.PrefetchScalarGridSpec(
            num_scalar_prefetch=0,
            grid=grid,
            in_specs=[pl.BlockSpec((tb, tk, tn), lambda b, n, k: (b, k, n))],
            out_specs=pl.BlockSpec((tb, tn), lambda b, n, k: (b, n)),
            scratch_shapes=[pltpu.VMEM((tb, sub, tn), jnp.float32)],
        ),
        compiler_params=pltpu.CompilerParams(
            dimension_semantics=("parallel", "parallel", "arbitrary"),
            vmem_limit_bytes=vmem_limit,
        ),
        cost_estimate=cost,
    )(x3)


# ---------------------------------------------------------------------------
# Variant 2: reduce the last axis in-kernel (K on lanes, surviving M on sublanes).
# ---------------------------------------------------------------------------

def _mean_lane_kernel(x_ref, o_ref, acc_ref, *, inv_k, k_total):
    # x_ref: (tb, tm, tk) block; o_ref: (tb, tm, 1); acc_ref: (tb, tm, 1) f32 scratch.
    k = pl.program_id(2)

    @pl.when(k == 0)
    def _():
        acc_ref[...] = jnp.zeros_like(acc_ref)

    tb, tm, tk = x_ref.shape
    xb = x_ref[...].astype(jnp.float32)
    if k_total % tk != 0:
        col = jax.lax.broadcasted_iota(jnp.int32, (tb, tm, tk), 2)
        valid = k_total - k * tk
        xb = jnp.where(col < valid, xb, 0.0)

    # Cross-lane (XLU) reduce — a free slot while the kernel is HBM-bound.
    acc_ref[...] += jnp.sum(xb, axis=-1, keepdims=True)

    @pl.when(k == pl.num_programs(2) - 1)
    def _():
        o_ref[...] = (acc_ref[...] * inv_k).astype(o_ref.dtype)


def _pick_lane_tiles(B, M, K, itemsize, budget):
    sub_a = _sublane_align(itemsize)
    # Lane (reduced) dim.
    tk = K if K <= _LANE else min(_round_down(K, _LANE), 2048)
    # Sublane (surviving) dim.
    if M <= sub_a:
        tm = M
    else:
        tm_cap = max(sub_a, _round_down(budget // (tk * itemsize), sub_a))
        tm = max(sub_a, min(_round_down(M, sub_a), 1024, tm_cap))
    # Leading dim.
    tb = max(1, min(B, budget // (tm * tk * itemsize)))
    return tb, tm, tk


def _mean_over_lane_axis(x3):
    """x3: (B, M, K) -> (B, M, 1), mean over the last (lane) axis."""
    B, M, K = x3.shape
    itemsize = jnp.dtype(x3.dtype).itemsize
    budget, vmem_limit = _vmem_budget()
    tb, tm, tk = _pick_lane_tiles(B, M, K, itemsize, budget)

    grid = (pl.cdiv(B, tb), pl.cdiv(M, tm), pl.cdiv(K, tk))
    kernel = functools.partial(_mean_lane_kernel, inv_k=1.0 / K, k_total=K)
    cost = pl.CostEstimate(flops=B * M * K, transcendentals=0,
                           bytes_accessed=B * M * K * itemsize + B * M * itemsize)

    return pl.pallas_call(
        kernel,
        out_shape=jax.ShapeDtypeStruct((B, M, 1), x3.dtype),
        grid_spec=pltpu.PrefetchScalarGridSpec(
            num_scalar_prefetch=0,
            grid=grid,
            in_specs=[pl.BlockSpec((tb, tm, tk), lambda b, m, k: (b, m, k))],
            out_specs=pl.BlockSpec((tb, tm, 1), lambda b, m, k: (b, m, 0)),
            scratch_shapes=[pltpu.VMEM((tb, tm, 1), jnp.float32)],
        ),
        compiler_params=pltpu.CompilerParams(
            dimension_semantics=("parallel", "parallel", "arbitrary"),
            vmem_limit_bytes=vmem_limit,
        ),
        cost_estimate=cost,
    )(x3)


# ---------------------------------------------------------------------------
# Public wrapper: JAX/Pallas equivalent of MeanLayer(dim)(x).
# ---------------------------------------------------------------------------

def mean_layer(x, dim):
    """x.mean(dim=dim, keepdim=True) for floating-point x."""
    if not jnp.issubdtype(x.dtype, jnp.floating):
        # torch.mean also rejects integer inputs.
        raise TypeError(f"mean_layer only supports floating dtypes, got {x.dtype}")

    ndim = x.ndim
    dim = dim % ndim
    shape = x.shape

    if ndim == 1:
        # (K,) -> lane-axis reduction on the (1, 1, K) view (lane-dense for K >= 128).
        out = _mean_over_lane_axis(x.reshape(1, 1, shape[0]))
        return out.reshape(1)

    if dim == ndim - 1:
        # Reduce the last axis directly on lanes: no wrapper transpose, 1x HBM traffic.
        B = math.prod(shape[:-2])
        M, K = shape[-2], shape[-1]
        out = _mean_over_lane_axis(x.reshape(B, M, K))
        return out.reshape(shape[:-1] + (1,))

    # Interior / leading axis: pure reshape to (B, K, N), reduce K on sublanes.
    # TODO(synk): when N = prod(shape[dim+1:]) < 128 the lane axis is sparse; a
    # relayout-free two-stage reduce for that case is not implemented.
    B = math.prod(shape[:dim])
    K = shape[dim]
    N = math.prod(shape[dim + 1:])
    out2 = _mean_over_sublane_axis(x.reshape(B, K, N))
    return out2.reshape(shape[:dim] + (1,) + shape[dim + 1:])


if __name__ == "__main__":
    key = jax.random.PRNGKey(0)
    x = jax.random.normal(key, (2, 4, 16, 16), dtype=jnp.float32)

    # Interior axis (sublane-reduction kernel, 8-sublane accumulator path).
    out = jax.block_until_ready(mean_layer(x, 2))
    ref = jnp.mean(x, axis=2, keepdims=True)
    assert out.shape == ref.shape, (out.shape, ref.shape)
    assert jnp.allclose(out, ref, atol=1e-5, rtol=1e-5)

    # Last axis (in-kernel lane reduction; no swapaxes HBM round trip).
    out_last = jax.block_until_ready(mean_layer(x, -1))
    ref_last = jnp.mean(x, axis=-1, keepdims=True)
    assert out_last.shape == ref_last.shape, (out_last.shape, ref_last.shape)
    assert jnp.allclose(out_last, ref_last, atol=1e-5, rtol=1e-5)

    # Leading axis with tiny K (plain-sum accumulator path).
    out0 = jax.block_until_ready(mean_layer(x, 0))
    ref0 = jnp.mean(x, axis=0, keepdims=True)
    assert out0.shape == ref0.shape, (out0.shape, ref0.shape)
    assert jnp.allclose(out0, ref0, atol=1e-5, rtol=1e-5)

    # Non-divisible K and N: exercises cdiv grid + masked K edge block.
    y = jax.random.normal(jax.random.PRNGKey(0), (3, 20, 130), dtype=jnp.float32)
    out_y = jax.block_until_ready(mean_layer(y, 1))
    ref_y = jnp.mean(y, axis=1, keepdims=True)
    assert out_y.shape == ref_y.shape, (out_y.shape, ref_y.shape)
    assert jnp.allclose(out_y, ref_y, atol=1e-5, rtol=1e-5)

    # 1-D input.
    v = jax.random.normal(key, (40,), dtype=jnp.float32)
    out_v = jax.block_until_ready(mean_layer(v, 0))
    ref_v = jnp.mean(v, axis=0, keepdims=True)
    assert out_v.shape == ref_v.shape, (out_v.shape, ref_v.shape)
    assert jnp.allclose(out_v, ref_v, atol=1e-5, rtol=1e-5)

    print("KERNEL_OK")
</pallas_src>

<mosaic_0001>
module attributes {stable_mosaic.version = 11 : i64} {
  func.func @_mean_sublane_kernel(%arg0: i32, %arg1: i32, %arg2: i32, %arg3: memref<8x16x16xf32, #tpu.memory_space<vmem>>, %arg4: memref<8x16xf32, #tpu.memory_space<vmem>>, %arg5: memref<8x8x16xf32, #tpu.memory_space<vmem>>) attributes {dimension_semantics = [#tpu.dimension_semantics<parallel>, #tpu.dimension_semantics<parallel>, #tpu.dimension_semantics<arbitrary>], iteration_bounds = array<i64: 1, 1, 1>, scalar_prefetch = 0 : i64, scratch_operands = 1 : i64, tpu.core_type = #tpu.core_type<tc>, window_params = [{transform_indices = @transform_0, window_bounds = array<i64: 8, 16, 16>}, {transform_indices = @transform_1, window_bounds = array<i64: 8, 16>}]} {
    %c0_i32 = arith.constant 0 : i32
    %0 = arith.cmpi eq, %arg2, %c0_i32 : i32
    %1 = arith.extui %0 : i1 to i32
    %c0_i32_0 = arith.constant 0 : i32
    %2 = arith.cmpi ne, %1, %c0_i32_0 : i32
    scf.if %2 {
      %cst_11 = arith.constant 0.000000e+00 : f32
      %12 = vector.broadcast %cst_11 : f32 to vector<8x8x16xf32>
      %c0_12 = arith.constant 0 : index
      %c0_13 = arith.constant 0 : index
      %c0_14 = arith.constant 0 : index
      %13 = vector.load %arg5[%c0_12, %c0_13, %c0_14] : memref<8x8x16xf32, #tpu.memory_space<vmem>>, vector<8x8x16xf32>
      tpu.vector_store %arg5[%c0_12, %c0_13, %c0_14], %12 {strides = array<i32>} : memref<8x8x16xf32, #tpu.memory_space<vmem>>, vector<8x8x16xf32>,
    } else {
    }
    %c0 = arith.constant 0 : index
    %c0_1 = arith.constant 0 : index
    %c0_2 = arith.constant 0 : index
    %3 = vector.load %arg3[%c0, %c0_1, %c0_2] : memref<8x16x16xf32, #tpu.memory_space<vmem>>, vector<8x16x16xf32>
    %c0_3 = arith.constant 0 : index
    %c0_4 = arith.constant 0 : index
    %c0_5 = arith.constant 0 : index
    %4 = vector.load %arg5[%c0_3, %c0_4, %c0_5] : memref<8x8x16xf32, #tpu.memory_space<vmem>>, vector<8x8x16xf32>
    %5 = vector.shape_cast %3 : vector<8x16x16xf32> to vector<8x2x8x16xf32>
    %cst = arith.constant dense<0.000000e+00> : vector<8x8x16xf32>
    %6 = vector.multi_reduction <add>, %5, %cst [1] : vector<8x2x8x16xf32> to vector<8x8x16xf32>
    %7 = arith.addf %4, %6 : vector<8x8x16xf32>
    %c0_6 = arith.constant 0 : index
    %c0_7 = arith.constant 0 : index
    %c0_8 = arith.constant 0 : index
    %8 = vector.load %arg5[%c0_6, %c0_7, %c0_8] : memref<8x8x16xf32, #tpu.memory_space<vmem>>, vector<8x8x16xf32>
    tpu.vector_store %arg5[%c0_6, %c0_7, %c0_8], %7 {strides = array<i32>} : memref<8x8x16xf32, #tpu.memory_space<vmem>>, vector<8x8x16xf32>,
    %c0_i32_9 = arith.constant 0 : i32
    %9 = arith.cmpi eq, %arg2, %c0_i32_9 : i32
    %10 = arith.extui %9 : i1 to i32
    %c0_i32_10 = arith.constant 0 : i32
    %11 = arith.cmpi ne, %10, %c0_i32_10 : i32
    scf.if %11 {
      %c0_11 = arith.constant 0 : index
      %c0_12 = arith.constant 0 : index
      %c0_13 = arith.constant 0 : index
      %12 = vector.load %arg5[%c0_11, %c0_12, %c0_13] : memref<8x8x16xf32, #tpu.memory_space<vmem>>, vector<8x8x16xf32>
      %cst_14 = arith.constant dense<0.000000e+00> : vector<8x16xf32>
      %13 = vector.multi_reduction <add>, %12, %cst_14 [1] : vector<8x8x16xf32> to vector<8x16xf32>
      %cst_15 = arith.constant 6.250000e-02 : f32
      %14 = vector.broadcast %cst_15 : f32 to vector<8x16xf32>
      %15 = arith.mulf %13, %14 : vector<8x16xf32>
      %c0_16 = arith.constant 0 : index
      %c0_17 = arith.constant 0 : index
      %16 = vector.load %arg4[%c0_16, %c0_17] : memref<8x16xf32, #tpu.memory_space<vmem>>, vector<8x16xf32>
      tpu.vector_store %arg4[%c0_16, %c0_17], %15 {strides = array<i32>} : memref<8x16xf32, #tpu.memory_space<vmem>>, vector<8x16xf32>,
    } else {
    }
    return
  }
  func.func @transform_0(%arg0: i32, %arg1: i32, %arg2: i32) -> (i32, i32, i32) {
    %c0_i32 = arith.constant 0 : i32
    return %arg0, %arg2, %arg1 : i32, i32, i32
  }
  func.func @transform_1(%arg0: i32, %arg1: i32, %arg2: i32) -> (i32, i32) {
    %c0_i32 = arith.constant 0 : i32
    return %arg0, %arg1 : i32, i32
  }
}

</mosaic_0001>

<llo_original>
// kernel: tpu_custom_call.1
$region0: #{tpu_custom_call.1}
  #allocation0 [shape = 'u32[]', space=smem, size = 0x4, offset = 0x4, fixed_abs, tag = 'smem constant byte address 0x4 - core index']
  #allocation1 [shape = 'u32[72,128]{1,0:T(1,128)}', space=vmem, size = 0x9000, scoped, tag = 'internal scratch']
  #allocation2 [shape = 'f32[8,8,16]{2,1,0:T(8,128)}', space=vmem, size = 0x8000, scoped, tag = 'scratch operand']
  %s0 = inlined_call_operand.hbm [shape: f32[8,16,16], index: 0, kind: input, shape index: {}]
  %s1 = inlined_call_operand.hbm [shape: f32[8,16], index: 1, kind: output, shape index: {}]
  %s2 = sld [smem:[#allocation0]]
  $region26: #{tpu_custom_call.1} parent=0
    _
  %s4 = ssub.s32 1, %s2
  %s5 = scalar_select 0, %s4, %s2
  $region1: #{tpu_custom_call.1} parent=0
    #allocation3 [shape = 'u8[65536]{0}', space=vmem, size = 0x10000, scoped, tag = 'input window, operand 0, single buffered']
    #allocation4 [shape = 's32[1]{0}', space=sflag, size = 0x4, scoped, tag = 'scoped memory for tpu_custom_call.1']
    #allocation5 [shape = 's32[1]{0}', space=sflag, size = 0x4, scoped, tag = 'scoped memory for tpu_custom_call.1']
    #allocation6 [shape = 'u8[4096]{0}', space=vmem, size = 0x1000, scoped, tag = 'output window, operand 0, single buffered']
    %6 = vsyncpa [#allocation4], 0
    %7 = vsyncpa [#allocation5], 0
    // Predicated region
    $region2: #{tpu_custom_call.1} parent=1 // pred_check
      _
    $region3: #{tpu_custom_call.1} parent=1 // pred_check_branch
      %9 = sbr.rel (0) target = $region5
    $region4: #{tpu_custom_call.1} parent=1 // pred_region
      %11 = vsyncadd [#allocation4], 0
      %s12 = sshll.u32 %s0, 4
      %s13 = int_to_ptr.hbm [resolvable:$true] %s12
      %s14 = sshll.u32 [#allocation3], 4
      %s15 = int_to_ptr.vmem [resolvable:$true] %s14
      %20 = dma.hbm_to_vmem [thread:$0]  %s13, 2048, %s15, [#allocation4], 128, 128, 8
    $region5: #{tpu_custom_call.1} parent=1 // pred_fallthru
      _
    // Predicated region
    $region6: #{tpu_custom_call.1} parent=1 // pred_check
      _
    $region7: #{tpu_custom_call.1} parent=1 // pred_check_branch
      %22 = sbr.rel (0) target = $region9
    $region8: #{tpu_custom_call.1} parent=1 // pred_region
      %24 = dma.done [#allocation4], 2048
    $region9: #{tpu_custom_call.1} parent=1 // pred_fallthru
      _
    %p25 = scmp.eq.s32.totalorder 0, 0
    // Predicated region
    $region10: #{tpu_custom_call.1} parent=1 // pred_check
      %p26 = pneg %p25
    $region11: #{tpu_custom_call.1} parent=1 // pred_check_branch
      %28 = sbr.rel (%p26) target = $region13
    $region12: #{tpu_custom_call.1} parent=1 // pred_region
      %vm29 = vcmask 130048
      %30 = vst.msk [vmem:[#allocation2] sm:$0xff] %vm29, 0.0
      %31 = vst.msk [vmem:[#allocation2 + $0x8] sm:$0xff] %vm29, 0.0
      %32 = vst.msk [vmem:[#allocation2 + $0x10] sm:$0xff] %vm29, 0.0
      %33 = vst.msk [vmem:[#allocation2 + $0x18] sm:$0xff] %vm29, 0.0
      %34 = vst.msk [vmem:[#allocation2 + $0x20] sm:$0xff] %vm29, 0.0
      %35 = vst.msk [vmem:[#allocation2 + $0x28] sm:$0xff] %vm29, 0.0
      %36 = vst.msk [vmem:[#allocation2 + $0x30] sm:$0xff] %vm29, 0.0
      %37 = vst.msk [vmem:[#allocation2 + $0x38] sm:$0xff] %vm29, 0.0
    $region13: #{tpu_custom_call.1} parent=1 // pred_fallthru
      _
    %v38 = vld [vmem:[#allocation3] sm:$0xff]
    %v39 = vld [vmem:[#allocation3 + $0x8] sm:$0xff]
    %v40 = vld [vmem:[#allocation3 + $0x10] sm:$0xff]
    %v41 = vld [vmem:[#allocation3 + $0x18] sm:$0xff]
    %v42 = vld [vmem:[#allocation3 + $0x20] sm:$0xff]
    %v43 = vld [vmem:[#allocation3 + $0x28] sm:$0xff]
    %v44 = vld [vmem:[#allocation3 + $0x30] sm:$0xff]
    %v45 = vld [vmem:[#allocation3 + $0x38] sm:$0xff]
    %v46 = vld [vmem:[#allocation3 + $0x40] sm:$0xff]
    %v47 = vld [vmem:[#allocation3 + $0x48] sm:$0xff]
    %v48 = vld [vmem:[#allocation3 + $0x50] sm:$0xff]
    %v49 = vld [vmem:[#allocation3 + $0x58] sm:$0xff]
    %v50 = vld [vmem:[#allocation3 + $0x60] sm:$0xff]
    %v51 = vld [vmem:[#allocation3 + $0x68] sm:$0xff]
    %v52 = vld [vmem:[#allocation3 + $0x70] sm:$0xff]
    %v53 = vld [vmem:[#allocation3 + $0x78] sm:$0xff]
    %v54 = vld [vmem:[#allocation2] sm:$0xff]
    %v55 = vld [vmem:[#allocation2 + $0x8] sm:$0xff]
    %v56 = vld [vmem:[#allocation2 + $0x10] sm:$0xff]
    %v57 = vld [vmem:[#allocation2 + $0x18] sm:$0xff]
    %v58 = vld [vmem:[#allocation2 + $0x20] sm:$0xff]
    %v59 = vld [vmem:[#allocation2 + $0x28] sm:$0xff]
    %v60 = vld [vmem:[#allocation2 + $0x30] sm:$0xff]
    %v61 = vld [vmem:[#allocation2 + $0x38] sm:$0xff]
    %vm62 = vcmask 130048
    %v63 = vsel %vm62, %v38, 0.0
    %v64 = vsel %vm62, %v39, 0.0
    %v65 = vadd.f32 %v63, %v64
    %v66 = vsel %vm62, %v40, 0.0
    %v67 = vsel %vm62, %v41, 0.0
    %v68 = vadd.f32 %v66, %v67
    %v69 = vsel %vm62, %v42, 0.0
    %v70 = vsel %vm62, %v43, 0.0
    %v71 = vadd.f32 %v69, %v70
    %v72 = vsel %vm62, %v44, 0.0
    %v73 = vsel %vm62, %v45, 0.0
    %v74 = vadd.f32 %v72, %v73
    %v75 = vsel %vm62, %v46, 0.0
    %v76 = vsel %vm62, %v47, 0.0
    %v77 = vadd.f32 %v75, %v76
    %v78 = vsel %vm62, %v48, 0.0
    %v79 = vsel %vm62, %v49, 0.0
    %v80 = vadd.f32 %v78, %v79
    %v81 = vsel %vm62, %v50, 0.0
    %v82 = vsel %vm62, %v51, 0.0
    %v83 = vadd.f32 %v81, %v82
    %v84 = vsel %vm62, %v52, 0.0
    %v85 = vsel %vm62, %v53, 0.0
    %v86 = vadd.f32 %v84, %v85
    %v87 = vadd.f32 %v54, %v65
    %v88 = vadd.f32 %v55, %v68
    %v89 = vadd.f32 %v56, %v71
    %v90 = vadd.f32 %v57, %v74
    %v91 = vadd.f32 %v58, %v77
    %v92 = vadd.f32 %v59, %v80
    %v93 = vadd.f32 %v60, %v83
    %v94 = vadd.f32 %v61, %v86
    %95 = vst.msk [vmem:[#allocation2] sm:$0xff] %vm62, %v87
    %96 = vst.msk [vmem:[#allocation2 + $0x8] sm:$0xff] %vm62, %v88
    %97 = vst.msk [vmem:[#allocation2 + $0x10] sm:$0xff] %vm62, %v89
    %98 = vst.msk [vmem:[#allocation2 + $0x18] sm:$0xff] %vm62, %v90
    %99 = vst.msk [vmem:[#allocation2 + $0x20] sm:$0xff] %vm62, %v91
    %100 = vst.msk [vmem:[#allocation2 + $0x28] sm:$0xff] %vm62, %v92
    %101 = vst.msk [vmem:[#allocation2 + $0x30] sm:$0xff] %vm62, %v93
    %102 = vst.msk [vmem:[#allocation2 + $0x38] sm:$0xff] %vm62, %v94
    // Predicated region
    $region14: #{tpu_custom_call.1} parent=1 // pred_check
      %p103 = pneg %p25
    $region15: #{tpu_custom_call.1} parent=1 // pred_check_branch
      %105 = sbr.rel (%p103) target = $region17
    $region16: #{tpu_custom_call.1} parent=1 // pred_region
      %v106 = vld [vmem:[#allocation2] sm:$0xff]
      %v107 = vld [vmem:[#allocation2 + $0x8] sm:$0xff]
      %v108 = vld [vmem:[#allocation2 + $0x10] sm:$0xff]
      %v109 = vld [vmem:[#allocation2 + $0x18] sm:$0xff]
      %v110 = vld [vmem:[#allocation2 + $0x20] sm:$0xff]
      %v111 = vld [vmem:[#allocation2 + $0x28] sm:$0xff]
      %v112 = vld [vmem:[#allocation2 + $0x30] sm:$0xff]
      %v113 = vld [vmem:[#allocation2 + $0x38] sm:$0xff]
      %v114 = vsel %vm62, %v106, 0.0
      %v115 = vrot.slane %v114, 4
      %v116 = vadd.f32 %v114, %v115
      %v117 = vrot.slane %v116, 2
      %v118 = vadd.f32 %v116, %v117
      %v119 = vrot.slane %v118, 1
      %v120 = vadd.f32 %v118, %v119
      %v121 = vsel %vm62, %v107, 0.0
      %v122 = vrot.slane %v121, 4
      %v123 = vadd.f32 %v121, %v122
      %v124 = vrot.slane %v123, 2
      %v125 = vadd.f32 %v123, %v124
      %v126 = vrot.slane %v125, 1
      %v127 = vadd.f32 %v125, %v126
      %v128 = vsel %vm62, %v108, 0.0
      %v129 = vrot.slane %v128, 4
      %v130 = vadd.f32 %v128, %v129
      %v131 = vrot.slane %v130, 2
      %v132 = vadd.f32 %v130, %v131
      %v133 = vrot.slane %v132, 1
      %v134 = vadd.f32 %v132, %v133
      %v135 = vsel %vm62, %v109, 0.0
      %v136 = vrot.slane %v135, 4
      %v137 = vadd.f32 %v135, %v136
      %v138 = vrot.slane %v137, 2
      %v139 = vadd.f32 %v137, %v138
      %v140 = vrot.slane %v139, 1
      %v141 = vadd.f32 %v139, %v140
      %v142 = vsel %vm62, %v110, 0.0
      %v143 = vrot.slane %v142, 4
      %v144 = vadd.f32 %v142, %v143
      %v145 = vrot.slane %v144, 2
      %v146 = vadd.f32 %v144, %v145
      %v147 = vrot.slane %v146, 1
      %v148 = vadd.f32 %v146, %v147
      %v149 = vsel %vm62, %v111, 0.0
      %v150 = vrot.slane %v149, 4
      %v151 = vadd.f32 %v149, %v150
      %v152 = vrot.slane %v151, 2
      %v153 = vadd.f32 %v151, %v152
      %v154 = vrot.slane %v153, 1
      %v155 = vadd.f32 %v153, %v154
      %v156 = vsel %vm62, %v112, 0.0
      %v157 = vrot.slane %v156, 4
      %v158 = vadd.f32 %v156, %v157
      %v159 = vrot.slane %v158, 2
      %v160 = vadd.f32 %v158, %v159
      %v161 = vrot.slane %v160, 1
      %v162 = vadd.f32 %v160, %v161
      %v163 = vsel %vm62, %v113, 0.0
      %v164 = vrot.slane %v163, 4
      %v165 = vadd.f32 %v163, %v164
      %v166 = vrot.slane %v165, 2
      %v167 = vadd.f32 %v165, %v166
      %v168 = vrot.slane %v167, 1
      %v169 = vadd.f32 %v167, %v168
      %v170 = vmul.f32 %v120, 0.0625
      %v171 = vmul.f32 %v127, 0.0625
      %v172 = vmul.f32 %v134, 0.0625
      %v173 = vmul.f32 %v141, 0.0625
      %v174 = vmul.f32 %v148, 0.0625
      %v175 = vmul.f32 %v155, 0.0625
      %v176 = vmul.f32 %v162, 0.0625
      %v177 = vmul.f32 %v169, 0.0625
      %vm186 = vcmask 1041409
      %v187 = vsel %vm186, %v171, %v170
      %vm188 = vcmask 1042434
      %v189 = vsel %vm188, %v172, %v187
      %vm190 = vcmask 1043459
      %v191 = vsel %vm190, %v173, %v189
      %vm192 = vcmask 1044484
      %v193 = vsel %vm192, %v174, %v191
      %vm194 = vcmask 1045509
      %v195 = vsel %vm194, %v175, %v193
      %vm196 = vcmask 1046534
      %v197 = vsel %vm196, %v176, %v195
      %vm198 = vcmask 1047559
      %v199 = vsel %vm198, %v177, %v197
      %201 = vst.msk [vmem:[#allocation6] sm:$0xff] %vm62, %v199
    $region17: #{tpu_custom_call.1} parent=1 // pred_fallthru
      _
    // Predicated region
    $region18: #{tpu_custom_call.1} parent=1 // pred_check
      _
    $region19: #{tpu_custom_call.1} parent=1 // pred_check_branch
      %203 = sbr.rel (0) target = $region21
    $region20: #{tpu_custom_call.1} parent=1 // pred_region
      %205 = vsyncadd [#allocation5], 0
      %s207 = sshll.u32 [#allocation6], 4
      %s208 = int_to_ptr.vmem [resolvable:$true] %s207
      %s209 = sshll.u32 %s1, 4
      %s210 = int_to_ptr.hbm [resolvable:$true] %s209
      %212 = dma.vmem_to_hbm [thread:$0]  %s208, 128, %s210, [#allocation5]
    $region21: #{tpu_custom_call.1} parent=1 // pred_fallthru
      _
    // Predicated region
    $region22: #{tpu_custom_call.1} parent=1 // pred_check
      _
    $region23: #{tpu_custom_call.1} parent=1 // pred_check_branch
      %214 = sbr.rel (0) target = $region25
    $region24: #{tpu_custom_call.1} parent=1 // pred_region
      %216 = dma.done [#allocation5], 128
    $region25: #{tpu_custom_call.1} parent=1 // pred_fallthru
      _
    %217 = vsyncpa [#allocation4], 1
    %218 = vsyncpa [#allocation5], 1

</llo_original>
